<compile_context>
chip_gen: v5e
topology: v5e:2x2
jax: 0.10.0
libtpu: 0.0.40
codegen_flags: <defaults>
</compile_context>

<pallas_src>
import jax
import jax.numpy as jnp
from jax.experimental import pallas as pl
from jax.experimental.pallas import tpu as pltpu


def se_kernel(x_ref, w1t_ref, w2t_ref, o_ref):
    # x_ref block: (Bt, C, HW)   lane-dense (HW multiple of 128)
    # w1t_ref:     (C, hidden)   = W1.T (pre-transposed in wrapper)
    # w2t_ref:     (hidden, C)   = W2.T (pre-transposed in wrapper)
    inv_hw = 1.0 / x_ref.shape[-1]

    # --- squeeze: global average pool (fp32-accumulated lane reduction) ---
    pooled = jnp.sum(x_ref[...], axis=-1, dtype=jnp.float32) * inv_hw   # (Bt, C)

    # --- excitation: fc1 -> ReLU -> fc2 -> sigmoid (tiny, fp32) ---
    h = jnp.dot(pooled, w1t_ref[...].astype(jnp.float32),
                preferred_element_type=jnp.float32)
    h = jnp.maximum(h, 0.0)                                             # (Bt, hidden)
    s = jnp.dot(h, w2t_ref[...].astype(jnp.float32),
                preferred_element_type=jnp.float32)
    s = jax.nn.sigmoid(s)                                               # (Bt, C)

    # --- scale: re-read x in native dtype, multiply by native-dtype scale ---
    o_ref[...] = x_ref[...] * s.astype(o_ref.dtype)[:, :, None]         # (Bt, C, HW)


def _pick_block_b(B, C, HW, itemsize, block_bytes_target=3 << 20, min_steps=4):
    """Largest batch block (divisor of B) whose single in-tile stays under
    ~block_bytes_target, while keeping >= min_steps grid steps when B allows
    so each v7x TensorCore gets >= 2 pipelined steps."""
    per_img = max(C * HW * itemsize, 1)
    best = 1
    for d in range(1, B + 1):
        if B % d == 0 and d * per_img <= block_bytes_target:
            best = d
    want_steps = min(min_steps, B)
    if B // best < want_steps:
        for d in range(best, 0, -1):
            if B % d == 0 and B // d >= want_steps:
                best = d
                break
    return max(best, 1)


def se_layer(x, w1, w2, *, block_b=None, alias_input=False):
    """x: (B, C, H, W); w1: (hidden, C); w2: (C, hidden)  (PyTorch Linear layout)."""
    B, C, H, W = x.shape
    HW = H * W
    hidden = w1.shape[0]

    # Lane-dense view of the activations; weights pre-transposed for y @ W.T.
    x2 = x.reshape(B, C, HW)
    w1_t = jnp.asarray(w1).T  # (C, hidden)
    w2_t = jnp.asarray(w2).T  # (hidden, C)

    itemsize = jnp.dtype(x.dtype).itemsize
    if block_b is None:
        block_b = _pick_block_b(B, C, HW, itemsize)
    assert B % block_b == 0, "block_b must divide B"
    grid = (B // block_b,)

    # Honest VMEM estimate: double-buffered in+out tiles, weights at their
    # actual dtype (budget 2 buffers each), and the small fp32 temporaries.
    blk_bytes = block_b * C * HW * itemsize
    w_bytes = (C * hidden + hidden * C) * jnp.dtype(w1_t.dtype).itemsize
    temp_bytes = block_b * (2 * C + hidden) * 4            # pooled, s, h (fp32)
    need = 4 * blk_bytes + 2 * w_bytes + temp_bytes + (2 << 20)

    cp_kwargs = dict(dimension_semantics=("parallel",))
    if need > (16 << 20):   # only override when the default scoped limit is exceeded
        cp_kwargs["vmem_limit_bytes"] = int(min(need, 48 << 20))  # v7x-safe cap

    call_kwargs = {}
    if alias_input:  # safe block-wise: each block is fully read before its write
        call_kwargs["input_output_aliases"] = {0: 0}

    out2 = pl.pallas_call(
        se_kernel,
        out_shape=jax.ShapeDtypeStruct((B, C, HW), x.dtype),
        grid_spec=pl.GridSpec(
            grid=grid,
            in_specs=[
                pl.BlockSpec((block_b, C, HW), lambda b: (b, 0, 0)),
                pl.BlockSpec((C, hidden), lambda b: (0, 0)),  # resident across grid
                pl.BlockSpec((hidden, C), lambda b: (0, 0)),  # resident across grid
            ],
            out_specs=pl.BlockSpec((block_b, C, HW), lambda b: (b, 0, 0)),
        ),
        compiler_params=pltpu.CompilerParams(**cp_kwargs),
        **call_kwargs,
    )(x2, w1_t, w2_t)

    return out2.reshape(B, C, H, W)


def se_layer_ref(x, w1, w2):
    # pure-JAX reference for correctness check
    y = jnp.mean(x, axis=(2, 3))                 # (B, C)
    y = jnp.maximum(y @ w1.T, 0.0)               # (B, hidden)
    y = jax.nn.sigmoid(y @ w2.T)                 # (B, C)
    return x * y[:, :, None, None]


if __name__ == "__main__":
    # Module config: in_channels=32, reduction=16 -> hidden = 32//16 = 2 < 16 -> 16
    B, C, H, W = 2, 32, 16, 16
    reduction = 16
    hidden = C // reduction if C // reduction >= 16 else 16

    key = jax.random.PRNGKey(0)
    kx, k1, k2 = jax.random.split(key, 3)

    x = jax.random.normal(kx, (B, C, H, W), dtype=jnp.float32)
    # Deterministic weight init (nn.Linear default: U(-1/sqrt(fan_in), 1/sqrt(fan_in)))
    w1 = jax.random.uniform(k1, (hidden, C), jnp.float32,
                            minval=-1.0 / jnp.sqrt(C), maxval=1.0 / jnp.sqrt(C))
    w2 = jax.random.uniform(k2, (C, hidden), jnp.float32,
                            minval=-1.0 / jnp.sqrt(hidden), maxval=1.0 / jnp.sqrt(hidden))

    out = se_layer(x, w1, w2)
    out = jax.block_until_ready(out)

    ref = se_layer_ref(x, w1, w2)
    assert out.shape == ref.shape
    assert jnp.allclose(out, ref, atol=1e-5, rtol=1e-5), "mismatch vs reference"

    print("KERNEL_OK")
</pallas_src>

<mosaic_0001>
module attributes {stable_mosaic.version = 11 : i64} {
  func.func @se_kernel(%arg0: i32, %arg1: memref<1x32x256xf32, #tpu.memory_space<vmem>>, %arg2: memref<32x16xf32, #tpu.memory_space<vmem>>, %arg3: memref<16x32xf32, #tpu.memory_space<vmem>>, %arg4: memref<1x32x256xf32, #tpu.memory_space<vmem>>) attributes {dimension_semantics = [#tpu.dimension_semantics<parallel>], iteration_bounds = array<i64: 2>, scalar_prefetch = 0 : i64, scratch_operands = 0 : i64, tpu.core_type = #tpu.core_type<tc>, window_params = [{transform_indices = @transform_0, window_bounds = array<i64: 1, 32, 256>}, {pipeline_mode = #tpu.pipeline_mode<synchronous>, transform_indices = @transform_1, window_bounds = array<i64: 32, 16>}, {pipeline_mode = #tpu.pipeline_mode<synchronous>, transform_indices = @transform_2, window_bounds = array<i64: 16, 32>}, {transform_indices = @transform_3, window_bounds = array<i64: 1, 32, 256>}]} {
    %c0 = arith.constant 0 : index
    %c0_0 = arith.constant 0 : index
    %c0_1 = arith.constant 0 : index
    %0 = vector.load %arg1[%c0, %c0_0, %c0_1] : memref<1x32x256xf32, #tpu.memory_space<vmem>>, vector<1x32x256xf32>
    %cst = arith.constant dense<0.000000e+00> : vector<1x32xf32>
    %1 = vector.multi_reduction <add>, %0, %cst [2] : vector<1x32x256xf32> to vector<1x32xf32>
    %cst_2 = arith.constant 3.906250e-03 : f32
    %2 = vector.broadcast %cst_2 : f32 to vector<1x32xf32>
    %3 = arith.mulf %1, %2 : vector<1x32xf32>
    %c0_3 = arith.constant 0 : index
    %c0_4 = arith.constant 0 : index
    %4 = vector.load %arg2[%c0_3, %c0_4] : memref<32x16xf32, #tpu.memory_space<vmem>>, vector<32x16xf32>
    %cst_5 = arith.constant dense<0.000000e+00> : vector<1x16xf32>
    %5 = tpu.matmul %3, %4, %cst_5 {dimension_numbers = #tpu.dot_dimension_numbers<[1], [0], [0], [1], [0, 0, 1, 1], [], []>} : vector<1x32xf32>, vector<32x16xf32>, vector<1x16xf32> -> vector<1x16xf32>
    %cst_6 = arith.constant 0.000000e+00 : f32
    %6 = vector.broadcast %cst_6 : f32 to vector<1x16xf32>
    %7 = arith.maximumf %5, %6 : vector<1x16xf32>
    %c0_7 = arith.constant 0 : index
    %c0_8 = arith.constant 0 : index
    %8 = vector.load %arg3[%c0_7, %c0_8] : memref<16x32xf32, #tpu.memory_space<vmem>>, vector<16x32xf32>
    %cst_9 = arith.constant dense<0.000000e+00> : vector<1x32xf32>
    %9 = tpu.matmul %7, %8, %cst_9 {dimension_numbers = #tpu.dot_dimension_numbers<[1], [0], [0], [1], [0, 0, 1, 1], [], []>} : vector<1x16xf32>, vector<16x32xf32>, vector<1x32xf32> -> vector<1x32xf32>
    %10 = arith.negf %9 : vector<1x32xf32>
    %11 = math.exp %10 : vector<1x32xf32>
    %cst_10 = arith.constant 1.000000e+00 : f32
    %12 = vector.broadcast %cst_10 : f32 to vector<1x32xf32>
    %13 = arith.addf %12, %11 : vector<1x32xf32>
    %14 = arith.divf %12, %13 : vector<1x32xf32>
    %c0_11 = arith.constant 0 : index
    %c0_12 = arith.constant 0 : index
    %c0_13 = arith.constant 0 : index
    %15 = vector.load %arg1[%c0_11, %c0_12, %c0_13] : memref<1x32x256xf32, #tpu.memory_space<vmem>>, vector<1x32x256xf32>
    %16 = vector.shape_cast %14 : vector<1x32xf32> to vector<1x32x1xf32>
    %17 = vector.broadcast %16 : vector<1x32x1xf32> to vector<1x32x256xf32>
    %18 = arith.mulf %15, %17 : vector<1x32x256xf32>
    %c0_14 = arith.constant 0 : index
    %c0_15 = arith.constant 0 : index
    %c0_16 = arith.constant 0 : index
    %19 = vector.load %arg4[%c0_14, %c0_15, %c0_16] : memref<1x32x256xf32, #tpu.memory_space<vmem>>, vector<1x32x256xf32>
    tpu.vector_store %arg4[%c0_14, %c0_15, %c0_16], %18 {strides = array<i32>} : memref<1x32x256xf32, #tpu.memory_space<vmem>>, vector<1x32x256xf32>,
    return
  }
  func.func @transform_0(%arg0: i32) -> (i32, i32, i32) {
    %c0_i32 = arith.constant 0 : i32
    %c0_i32_0 = arith.constant 0 : i32
    %c0_i32_1 = arith.constant 0 : i32
    return %arg0, %c0_i32, %c0_i32_0 : i32, i32, i32
  }
  func.func @transform_1(%arg0: i32) -> (i32, i32) {
    %c0_i32 = arith.constant 0 : i32
    %c0_i32_0 = arith.constant 0 : i32
    %c0_i32_1 = arith.constant 0 : i32
    return %c0_i32, %c0_i32_0 : i32, i32
  }
  func.func @transform_2(%arg0: i32) -> (i32, i32) {
    %c0_i32 = arith.constant 0 : i32
    %c0_i32_0 = arith.constant 0 : i32
    %c0_i32_1 = arith.constant 0 : i32
    return %c0_i32, %c0_i32_0 : i32, i32
  }
  func.func @transform_3(%arg0: i32) -> (i32, i32, i32) {
    %c0_i32 = arith.constant 0 : i32
    %c0_i32_0 = arith.constant 0 : i32
    %c0_i32_1 = arith.constant 0 : i32
    return %arg0, %c0_i32, %c0_i32_0 : i32, i32, i32
  }
}

</mosaic_0001>

<llo_original>
// kernel: tpu_custom_call.1
$region0: #{tpu_custom_call.1}
  #allocation0 [shape = 'u32[]', space=smem, size = 0x4, offset = 0x4, fixed_abs, tag = 'smem constant byte address 0x4 - core index']
  #allocation1 [shape = 'u32[72,128]{1,0:T(1,128)}', space=vmem, size = 0x9000, scoped, tag = 'internal scratch']
  %s0 = inlined_call_operand.hbm [shape: f32[2,32,256], index: 0, kind: input, shape index: {}]
  %s1 = inlined_call_operand.vmem [shape: f32[32,16], index: 1, kind: input, shape index: {}]
  %s2 = inlined_call_operand.vmem [shape: f32[16,32], index: 2, kind: input, shape index: {}]
  %s3 = inlined_call_operand.hbm [shape: f32[2,32,256], index: 3, kind: output, shape index: {}]
  %s4 = sld [smem:[#allocation0]]
  $region49: #{tpu_custom_call.1} parent=0
    _
  %s6 = ssub.s32 1, %s4
  %s7 = scalar_select 0, %s6, %s4
  $region1: #{tpu_custom_call.1} parent=0
    #allocation2 [shape = 'u8[65536]{0}', space=vmem, size = 0x10000, scoped, tag = 'input window, operand 0']
    #allocation3 [shape = 's32[2]{0}', space=sflag, size = 0x8, scoped, tag = 'scoped memory for tpu_custom_call.1']
    #allocation4 [shape = 's32[2]{0}', space=sflag, size = 0x8, scoped, tag = 'scoped memory for tpu_custom_call.1']
    #allocation5 [shape = 'u8[65536]{0}', space=vmem, size = 0x10000, scoped, tag = 'output window, operand 0']
    %8 = vsyncpa [#allocation3], 0
    %s9 = scalar_lea.sflag [#allocation3], 1
    %10 = vsyncpa %s9, 0
    %11 = vsyncpa [#allocation4], 0
    %s12 = scalar_lea.sflag [#allocation4], 1
    %13 = vsyncpa %s12, 0
    loop: start=0, step=1, limit=4
    $region2: #{tpu_custom_call.1} parent=1 // loop_pre_header
      _
    $region3: #{tpu_custom_call.1} parent=1 // loop_header
      %s15 = sphi 0, %s19
      %p16 = scmp.ge.s32.totalorder %s15, 4
      %s25 = sphi 0, %s27
      %s28 = sphi 0, %s25
      %s29 = sphi 0, %s28
      %s45 = sphi 0, %s29
      %s49 = sphi 0, %s49
      %s51 = sphi 0, %s49
      %s52 = sphi 0, %s51
      %s66 = sphi 0, %s52
      %s70 = sphi 0, %s70
      %s72 = sphi 0, %s70
      %s73 = sphi 0, %s72
      %s87 = sphi 0, %s73
      %s93 = sphi 0, %s95
      %s96 = sphi 0, %s93
      %s97 = sphi 0, %s96
      %s113 = sphi 0, %s97
    $region4: #{tpu_custom_call.1} parent=1 // loop_header_branch
      %18 = sbr.rel (%p16) target = $region8
    $region5: #{tpu_custom_call.1} parent=1 // loop_body
      %s20 = ssub.s32 %s15, 1
      %s21 = ssub.s32 %s15, 2
      %s22 = sadd.s32 %s15, 1
      %s23 = ssub.s32 %s15, %s22
      %p24 = scmp.eq.s32.totalorder %s23, 0
      %s26 = sadd.s32 %s25, 1
      %s27 = scalar_select %p24, %s25, %s26
      %p30 = pneg %p24
      %p31 = scmp.eq.s32.totalorder %s15, 1
      %p32 = por %p30, %p31
      %p33 = scmp.ne.s32.totalorder %s25, %s28
      %p34 = scmp.eq.s32.totalorder %s15, 0
      %p35 = por %p33, %p34
      %p36 = scmp.ne.s32.totalorder %s25, %s28
      %p37 = scmp.eq.s32.totalorder %s20, 1
      %p38 = por %p36, %p37
      %p39 = scmp.ne.s32.totalorder %s28, %s29
      %p40 = scmp.eq.s32.totalorder %s20, 0
      %p41 = por %p39, %p40
      %p42 = scmp.ne.s32.totalorder %s28, %s29
      %p43 = scmp.eq.s32.totalorder %s21, 1
      %p44 = por %p42, %p43
      %p46 = scmp.ne.s32.totalorder %s29, %s45
      %p47 = scmp.eq.s32.totalorder %s21, 0
      %p48 = por %p46, %p47
      %s50 = sadd.s32 %s49, 1
      %p53 = scmp.eq.s32.totalorder %s15, 1
      %p54 = scmp.ne.s32.totalorder %s49, %s51
      %p55 = scmp.eq.s32.totalorder %s15, 0
      %p56 = por %p54, %p55
      %p57 = scmp.ne.s32.totalorder %s49, %s51
      %p58 = scmp.eq.s32.totalorder %s20, 1
      %p59 = por %p57, %p58
      %p60 = scmp.ne.s32.totalorder %s51, %s52
      %p61 = scmp.eq.s32.totalorder %s20, 0
      %p62 = por %p60, %p61
      %p63 = scmp.ne.s32.totalorder %s51, %s52
      %p64 = scmp.eq.s32.totalorder %s21, 1
      %p65 = por %p63, %p64
      %p67 = scmp.ne.s32.totalorder %s52, %s66
      %p68 = scmp.eq.s32.totalorder %s21, 0
      %p69 = por %p67, %p68
      %s71 = sadd.s32 %s70, 1
      %p74 = scmp.eq.s32.totalorder %s15, 1
      %p75 = scmp.ne.s32.totalorder %s70, %s72
      %p76 = scmp.eq.s32.totalorder %s15, 0
      %p77 = por %p75, %p76
      %p78 = scmp.ne.s32.totalorder %s70, %s72
      %p79 = scmp.eq.s32.totalorder %s20, 1
      %p80 = por %p78, %p79
      %p81 = scmp.ne.s32.totalorder %s72, %s73
      %p82 = scmp.eq.s32.totalorder %s20, 0
      %p83 = por %p81, %p82
      %p84 = scmp.ne.s32.totalorder %s72, %s73
      %p85 = scmp.eq.s32.totalorder %s21, 1
      %p86 = por %p84, %p85
      %p88 = scmp.ne.s32.totalorder %s73, %s87
      %p89 = scmp.eq.s32.totalorder %s21, 0
      %p90 = por %p88, %p89
      %s91 = ssub.s32 %s15, %s22
      %p92 = scmp.eq.s32.totalorder %s91, 0
      %s94 = sadd.s32 %s93, 1
      %s95 = scalar_select %p92, %s93, %s94
      %p98 = pneg %p92
      %p99 = scmp.eq.s32.totalorder %s15, 1
      %p100 = por %p98, %p99
      %p101 = scmp.ne.s32.totalorder %s93, %s96
      %p102 = scmp.eq.s32.totalorder %s15, 0
      %p103 = por %p101, %p102
      %p104 = scmp.ne.s32.totalorder %s93, %s96
      %p105 = scmp.eq.s32.totalorder %s20, 1
      %p106 = por %p104, %p105
      %p107 = scmp.ne.s32.totalorder %s96, %s97
      %p108 = scmp.eq.s32.totalorder %s20, 0
      %p109 = por %p107, %p108
      %p110 = scmp.ne.s32.totalorder %s96, %s97
      %p111 = scmp.eq.s32.totalorder %s21, 1
      %p112 = por %p110, %p111
      %p114 = scmp.ne.s32.totalorder %s97, %s113
      %p115 = scmp.eq.s32.totalorder %s21, 0
      %p116 = por %p114, %p115
      %p117 = scmp.le.s32.totalorder 1, %s15
      %p118 = scmp.lt.s32.totalorder %s15, 3
      %p119 = pnand %p117, %p118
      %p120 = pneg %p119
      // Predicated region
      $region9: #{tpu_custom_call.1} parent=5 // pred_check
        _
      $region10: #{tpu_custom_call.1} parent=5 // pred_check_branch
        %122 = sbr.rel (%p119) target = $region12
      $region11: #{tpu_custom_call.1} parent=5 // pred_region
        %s123 = ssub.s32 %s15, 1
        // Predicated region
        $region13: #{tpu_custom_call.1} parent=11 // pred_check
          %p124 = pneg %p62
        $region14: #{tpu_custom_call.1} parent=11 // pred_check_branch
          %126 = sbr.rel (%p124) target = $region16
        $region15: #{tpu_custom_call.1} parent=11 // pred_region
          _
        $region16: #{tpu_custom_call.1} parent=11 // pred_fallthru
          _
        // Predicated region
        $region17: #{tpu_custom_call.1} parent=11 // pred_check
          %p127 = pneg %p83
        $region18: #{tpu_custom_call.1} parent=11 // pred_check_branch
          %129 = sbr.rel (%p127) target = $region20
        $region19: #{tpu_custom_call.1} parent=11 // pred_region
          _
        $region20: #{tpu_custom_call.1} parent=11 // pred_fallthru
          _
      $region12: #{tpu_custom_call.1} parent=5 // pred_fallthru
        _
      %p130 = scmp.lt.s32.totalorder %s15, 2
      // Predicated region
      $region21: #{tpu_custom_call.1} parent=5 // pred_check
        %p131 = pneg %p130
      $region22: #{tpu_custom_call.1} parent=5 // pred_check_branch
        %133 = sbr.rel (%p131) target = $region24
      $region23: #{tpu_custom_call.1} parent=5 // pred_region
        // Predicated region
        $region25: #{tpu_custom_call.1} parent=23 // pred_check
          %p134 = pneg %p35
        $region26: #{tpu_custom_call.1} parent=23 // pred_check_branch
          %136 = sbr.rel (%p134) target = $region28
        $region27: #{tpu_custom_call.1} parent=23 // pred_region
          %s137 = sand.u32 %s25, 1
          %s138 = scalar_lea.sflag [#allocation3], %s137
          %s139 = sand.u32 %s25, 1
          %s140 = smul.addr %s139, 64
          %s141 = scalar_lea.vmem [#allocation2], %s140
          %143 = vsyncadd %s138, 0
          %s144 = smul.addr %s15, 8
          %s145 = smul.addr %s144, 8
          %s146 = scalar_lea.hbm %s0, %s145
          %s147 = sshll.u32 %s146, 4
          %s148 = int_to_ptr.hbm [resolvable:$true] %s147
          %s149 = sshll.u32 %s141, 4
          %s150 = int_to_ptr.vmem [resolvable:$true] %s149
          %155 = dma.hbm_to_vmem [thread:$0]  %s148, 1024, %s150, %s138, 256, 256, 16
        $region28: #{tpu_custom_call.1} parent=23 // pred_fallthru
          _
      $region24: #{tpu_custom_call.1} parent=5 // pred_fallthru
        _
      %p156 = scmp.le.s32.totalorder 1, %s15
      %p157 = scmp.lt.s32.totalorder %s15, 3
      %p158 = pnand %p156, %p157
      %p159 = pneg %p158
      // Predicated region
      $region29: #{tpu_custom_call.1} parent=5 // pred_check
        _
      $region30: #{tpu_custom_call.1} parent=5 // pred_check_branch
        %161 = sbr.rel (%p158) target = $region32
      $region31: #{tpu_custom_call.1} parent=5 // pred_region
        %s162 = ssub.s32 %s15, 1
        %s163 = sand.u32 %s28, 1
        %s164 = scalar_lea.sflag [#allocation3], %s163
        %s165 = sand.u32 %s28, 1
        %s166 = smul.addr %s165, 64
        %s167 = scalar_lea.vmem [#allocation2], %s166
        // Predicated region
        $region33: #{tpu_custom_call.1} parent=31 // pred_check
          %p168 = pneg %p41
        $region34: #{tpu_custom_call.1} parent=31 // pred_check_branch
          %170 = sbr.rel (%p168) target = $region36
        $region35: #{tpu_custom_call.1} parent=31 // pred_region
          %172 = dma.done %s164, 1024
        $region36: #{tpu_custom_call.1} parent=31 // pred_fallthru
          _
        %s173 = sand.u32 %s28, 1
        %s174 = scalar_lea.sflag [#allocation3], %s173
        %s175 = sand.u32 %s28, 1
        %s176 = smul.addr %s175, 64
        %s177 = scalar_lea.vmem [#allocation2], %s176
        %p178 = pneg %p41
        %p179 = pneg %p38
        %p180 = pneg %p62
        %p181 = pneg %p59
        %p182 = pneg %p83
        %p183 = pneg %p80
        %p184 = pneg %p109
        %p185 = pneg %p106
        %s186 = sand.u32 %s96, 1
        %s187 = scalar_lea.sflag [#allocation4], %s186
        %s188 = sand.u32 %s96, 1
        %s189 = smul.addr %s188, 64
        %s190 = scalar_lea.vmem [#allocation5], %s189
        %v191 = vld [vmem:[%s167] sm:$0xff]
        %v192 = vld [vmem:[%s167 + $0x8] sm:$0xff]
        %v193 = vld [vmem:[%s167 + $0x10] sm:$0xff]
        %v194 = vld [vmem:[%s167 + $0x18] sm:$0xff]
        %v195 = vld [vmem:[%s167 + $0x20] sm:$0xff]
        %v196 = vld [vmem:[%s167 + $0x28] sm:$0xff]
        %v197 = vld [vmem:[%s167 + $0x30] sm:$0xff]
        %v198 = vld [vmem:[%s167 + $0x38] sm:$0xff]
        %v199 = vadd.f32 %v191, %v192
        %200 = vadd.xlane.f32.xlu0 %v199
        %v201 = vpop.xlane.xlu0 %200
        %v202 = vadd.f32 %v193, %v194
        %203 = vadd.xlane.f32.xlu0 %v202
        %v204 = vpop.xlane.xlu0 %203
        %v205 = vadd.f32 %v195, %v196
        %206 = vadd.xlane.f32.xlu0 %v205
        %v207 = vpop.xlane.xlu0 %206
        %v208 = vadd.f32 %v197, %v198
        %209 = vadd.xlane.f32.xlu0 %v208
        %v210 = vpop.xlane.xlu0 %209
        %v211 = vmul.f32 %v201, 0.00390625
        %v212 = vmul.f32 %v204, 0.00390625
        %v213 = vmul.f32 %v207, 0.00390625
        %v214 = vmul.f32 %v210, 0.00390625
        %v215 = vld [vmem:[%s1] sm:$0xff]
        %v216 = vld [vmem:[%s1 + $0x8] sm:$0xff]
        %v217 = vld [vmem:[%s1 + $0x10] sm:$0xff]
        %v218 = vld [vmem:[%s1 + $0x18] sm:$0xff]
        %v223 = vlaneseq
        %v224 = vand.u32 %v223, 127
        %v225 = vperm.slane %v211, %v224
        %v226 = vadd.s32 %v224, 4294967288
        %v227 = vperm.slane %v212, %v226
        %vm228 = vcmask 130112
        %v229 = vsel %vm228, %v227, %v225
        %v230 = vadd.s32 %v224, 4294967280
        %v231 = vperm.slane %v213, %v230
        %vm232 = vcmask 195712
        %v233 = vsel %vm232, %v231, %v229
        %v234 = vadd.s32 %v224, 4294967272
        %v235 = vperm.slane %v214, %v234
        %vm236 = vcmask 261312
        %v237 = vsel %vm236, %v235, %v233
        %vm238 = vcmask 261120
        %v239 = vsel %vm238, %v237, 0
        %241 = vmatpush.msra.mxu0 0.0
        %242 = vmatpush.msra.mxu0 0.0
        %243 = vmatpush.msra.mxu0 0.0
        %244 = vmatpush.msra.mxu0 0.0
        %245 = vmatpush.msra.mxu0 0.0
        %246 = vmatpush.msra.mxu0 0.0
        %247 = vmatpush.msra.mxu0 0.0
        %248 = vmatpush.msra.mxu0 0.0
        %249 = vmatpush.msra.mxu0 0.0
        %250 = vmatpush.msra.mxu0 0.0
        %251 = vmatpush.msra.mxu0 0.0
        %252 = vmatpush.msra.mxu0 0.0
        %253 = vmatpush.msra.mxu0 %v218
        %254 = vmatpush.msra.mxu0 %v217
        %255 = vmatpush.msra.mxu0 %v216
        %256 = vmatpush.msra.mxu0 %v215
        %257 = vmatmul.f32.gmra.mxu0 %v239
        %v258 = vpop.f32.mrf.mxu0
        %v259 = vadd.f32 0.0, %v258
        %260 = vdwg.mxu0
        %v261 = vmax.f32 %v259, 0.0
        %v262 = vld [vmem:[%s2] sm:$0xff]
        %v263 = vld [vmem:[%s2 + $0x8] sm:$0xff]
        %vm264 = vcmask 130048
        %v266 = vsel %vm264, %v261, 0
        %268 = vmatpush.msra.mxu0 0.0
        %269 = vmatpush.msra.mxu0 0.0
        %270 = vmatpush.msra.mxu0 0.0
        %271 = vmatpush.msra.mxu0 0.0
        %272 = vmatpush.msra.mxu0 0.0
        %273 = vmatpush.msra.mxu0 0.0
        %274 = vmatpush.msra.mxu0 0.0
        %275 = vmatpush.msra.mxu0 0.0
        %276 = vmatpush.msra.mxu0 0.0
        %277 = vmatpush.msra.mxu0 0.0
        %278 = vmatpush.msra.mxu0 0.0
        %279 = vmatpush.msra.mxu0 0.0
        %280 = vmatpush.msra.mxu0 0.0
        %281 = vmatpush.msra.mxu0 0.0
        %282 = vmatpush.msra.mxu0 %v263
        %283 = vmatpush.msra.mxu0 %v262
        %284 = vmatmul.f32.gmra.mxu0 %v266
        %v285 = vpop.f32.mrf.mxu0
        %v286 = vadd.f32 0.0, %v285
        %287 = vdwg.mxu0
        %v288 = vxor.u32 %v286, 2147483648
        %v289 = vmul.f32 %v288, 1.442695
        %v290 = vpow.pop %v289
        %v291 = vadd.f32 %v290, 1.0
        %v292 = vrcp.pop %v291
        %v293 = vmul.f32 %v291, %v292
        %v294 = vsub.f32 1.0, %v293
        %v295 = vmul.f32 %v292, %v294
        %v296 = vadd.f32 %v292, %v295
        %vm297 = vweird.f32 %v291
        %vm298 = vweird.f32 %v292
        %vm299 = vmor %vm297, %vm298
        %v300 = vsel %vm299, %v292, %v296
        %v301 = vand.u32 2147483647, %v291
        %vm302 = vcmp.eq.f32.partialorder %v301, 8.507059e+37
        %v303 = vand.u32 %v291, 2147483648
        %v304 = vor.u32 1.1754944e-38, %v303
        %v305 = vsel %vm302, %v304, %v300
        %v306 = vmul.f32 1.0, %v305
        %v307 = vperm.slane %v306, 0
        %v308 = vlaneseq
        %v309 = vshrl.u32 %v308, 7
        %311 = vset.pattern.permute.xlu0 %v309
        %312 = vperm.xlu0 %311, %v307
        %v313 = vpop.permute.xlu0 %312
        %v314 = vlaneseq
        %v315 = vshrl.u32 %v314, 7
        %v316 = vadd.s32 %v315, 8
        %317 = vset.pattern.permute.xlu0 %v316
        %318 = vperm.xlu0 %317, %v307
        %v319 = vpop.permute.xlu0 %318
        %v320 = vlaneseq
        %v321 = vshrl.u32 %v320, 7
        %v322 = vadd.s32 %v321, 16
        %323 = vset.pattern.permute.xlu0 %v322
        %324 = vperm.xlu0 %323, %v307
        %v325 = vpop.permute.xlu0 %324
        %v326 = vlaneseq
        %v327 = vshrl.u32 %v326, 7
        %v328 = vadd.s32 %v327, 24
        %329 = vset.pattern.permute.xlu0 %v328
        %330 = vperm.xlu0 %329, %v307
        %v331 = vpop.permute.xlu0 %330
        %v332 = vmul.f32 %v191, %v313
        %v333 = vmul.f32 %v192, %v313
        %v334 = vmul.f32 %v193, %v319
        %v335 = vmul.f32 %v194, %v319
        %v336 = vmul.f32 %v195, %v325
        %v337 = vmul.f32 %v196, %v325
        %v338 = vmul.f32 %v197, %v331
        %v339 = vmul.f32 %v198, %v331
        %340 = vst [vmem:[%s190] sm:$0xff] %v332
        %341 = vst [vmem:[%s190 + $0x8] sm:$0xff] %v333
        %342 = vst [vmem:[%s190 + $0x10] sm:$0xff] %v334
        %343 = vst [vmem:[%s190 + $0x18] sm:$0xff] %v335
        %344 = vst [vmem:[%s190 + $0x20] sm:$0xff] %v336
        %345 = vst [vmem:[%s190 + $0x28] sm:$0xff] %v337
        %346 = vst [vmem:[%s190 + $0x30] sm:$0xff] %v338
        %347 = vst [vmem:[%s190 + $0x38] sm:$0xff] %v339
        %s348 = sand.u32 %s96, 1
        %s349 = scalar_lea.sflag [#allocation4], %s348
        %s350 = sand.u32 %s96, 1
        %s351 = smul.addr %s350, 64
        %s352 = scalar_lea.vmem [#allocation5], %s351
        // Predicated region
        $region37: #{tpu_custom_call.1} parent=31 // pred_check
          %p353 = pneg %p106
        $region38: #{tpu_custom_call.1} parent=31 // pred_check_branch
          %355 = sbr.rel (%p353) target = $region40
        $region39: #{tpu_custom_call.1} parent=31 // pred_region
          %357 = vsyncadd %s349, 0
          %s358 = smul.addr %s20, 8
          %s359 = smul.addr %s358, 8
          %s360 = scalar_lea.hbm %s3, %s359
          %s361 = sshll.u32 %s352, 4
          %s362 = int_to_ptr.vmem [resolvable:$true] %s361
          %s363 = sshll.u32 %s360, 4
          %s364 = int_to_ptr.hbm [resolvable:$true] %s363
          %369 = dma.vmem_to_hbm [thread:$0]  %s362, 1024, %s364, %s349, 256, 256, 16
        $region40: #{tpu_custom_call.1} parent=31 // pred_fallthru
          _
      $region32: #{tpu_custom_call.1} parent=5 // pred_fallthru
        _
      %p370 = scmp.le.s32.totalorder 2, %s15
      // Predicated region
      $region41: #{tpu_custom_call.1} parent=5 // pred_check
        %p371 = pneg %p370
      $region42: #{tpu_custom_call.1} parent=5 // pred_check_branch
        %373 = sbr.rel (%p371) target = $region44
      $region43: #{tpu_custom_call.1} parent=5 // pred_region
        %s374 = ssub.s32 %s15, 2
        // Predicated region
        $region45: #{tpu_custom_call.1} parent=43 // pred_check
          %p375 = pneg %p112
        $region46: #{tpu_custom_call.1} parent=43 // pred_check_branch
          %377 = sbr.rel (%p375) target = $region48
        $region47: #{tpu_custom_call.1} parent=43 // pred_region
          %s378 = sand.u32 %s97, 1
          %s379 = scalar_lea.sflag [#allocation4], %s378
          %s380 = sand.u32 %s97, 1
          %s381 = smul.addr %s380, 64
          %s382 = scalar_lea.vmem [#allocation5], %s381
          %384 = dma.done %s379, 1024
        $region48: #{tpu_custom_call.1} parent=43 // pred_fallthru
          _
      $region44: #{tpu_custom_call.1} parent=5 // pred_fallthru
        _
    $region6: #{tpu_custom_call.1} parent=1 // loop_footer
      %s19 = sadd.s32 1, %s15
    $region7: #{tpu_custom_call.1} parent=1 // loop_footer_branch
      %14 = sbr.rel target = $region3
    $region8: #{tpu_custom_call.1} parent=1 // loop_exit
      _
    %385 = vsyncpa [#allocation3], 1
    %s386 = scalar_lea.sflag [#allocation3], 1
    %387 = vsyncpa %s386, 1
    %388 = vsyncpa [#allocation4], 1
    %s389 = scalar_lea.sflag [#allocation4], 1
    %390 = vsyncpa %s389, 1

</llo_original>
